<compile_context>
chip_gen: v6e
topology: v6e:2x2x1
jax: 0.10.0
libtpu: 0.0.40
codegen_flags: <defaults>
</compile_context>

<pallas_src>
import jax
import jax.numpy as jnp
from jax.experimental import pallas as pl
from jax.experimental.pallas import tpu as pltpu

IN_FEATURES = 784                      # the module hardcodes 784 scalar weights
_LANE = 128
_SUBLANE = 8
_LANES_PADDED = ((IN_FEATURES + _LANE - 1) // _LANE) * _LANE   # 784 -> 896


def _default_batch_tile():
    """Per-generation batch tile; conservative fallback if detection fails."""
    try:
        kind = jax.devices()[0].device_kind.lower()
    except Exception:
        return 1024
    if "7x" in kind or "v7" in kind:
        return 4096          # v7x: ~3.2 TB/s HBM -> bigger tile amortizes per-step cost
    if "v6" in kind or "6 lite" in kind or "6e" in kind:
        return 2048          # v6e
    return 1024              # v5e (16 MiB default scoped VMEM) and unknown chips


def linearnet_kernel(x_ref, w_ref, b_ref, o_ref):
    # x_ref: (TB, 784) VMEM streamed tile
    # w_ref: (1, 784)  VMEM, resident across the grid
    # b_ref: (1, 1)    SMEM, resident
    # o_ref: (1, TB)   VMEM, lane-dense output row for this tile
    x = x_ref[...].astype(jnp.float32)      # in-kernel cast (VPU slack); bf16 inputs OK
    w = w_ref[...]                          # (1, 784) broadcasts over batch rows
    bias = b_ref[0, 0]                      # scalar from SMEM
    # VPU multiply + XLU lane-reduce; exact f32 (deliberately NOT routed to the
    # MXU: default-precision f32 matmul would break 1e-5 accuracy, and compute
    # is hidden under the HBM-bound DMA anyway).
    s = jnp.sum(x * w, axis=-1) + bias      # (TB,)
    o_ref[...] = s.reshape(1, -1)           # lane-dense (1, TB) store


def linearnet_forward(x, weights, bias, *, batch_tile=None):
    """x: (B, 784); weights: (784,); bias: () or (1,)  ->  (B, 1) float32."""
    B, F = x.shape
    assert F == IN_FEATURES, f"expected {IN_FEATURES} features, got {F}"
    if batch_tile is None:
        batch_tile = _default_batch_tile()

    w2d = jnp.asarray(weights, jnp.float32).reshape(1, IN_FEATURES)
    b2d = jnp.asarray(bias, jnp.float32).reshape(1, 1)

    # Tile the batch axis; if B fits in one tile, use the full batch as the
    # block (block_shape == full array dim is always legal).  Otherwise use the
    # per-generation tile (a multiple of 8/128) and let pl.cdiv handle the
    # ragged last tile (Pallas pads the read; excess output rows are sliced
    # off by the wrapper).
    TB = B if B <= batch_tile else batch_tile
    num_tiles = pl.cdiv(B, TB)

    itemsize = jnp.dtype(x.dtype).itemsize
    # Explicit VMEM budget from *padded* block shapes (double-buffered inputs
    # and outputs), plus slack for Mosaic internal scratch.
    in_block_bytes = TB * _LANES_PADDED * itemsize                   # (TB, 896)
    out_block_bytes = _SUBLANE * max(TB, _LANE) * 4                  # (1, TB) -> (8, >=128)
    w_block_bytes = _SUBLANE * _LANES_PADDED * 4                     # (1, 784) -> (8, 896)
    vmem_limit = int(2 * (in_block_bytes + out_block_bytes + w_block_bytes) + (2 << 20))
    vmem_limit = min(vmem_limit, 56 << 20)   # stay well under v7x's 64 MiB/TC physical VMEM

    cost = pl.CostEstimate(
        flops=2 * B * IN_FEATURES,
        transcendentals=0,
        bytes_accessed=B * IN_FEATURES * itemsize + IN_FEATURES * 4 + B * 4,
    )

    out = pl.pallas_call(
        linearnet_kernel,
        out_shape=jax.ShapeDtypeStruct((num_tiles, TB), jnp.float32),
        grid=(num_tiles,),
        in_specs=[
            # streamed batch tiles (double-buffered by the Pallas pipeline)
            pl.BlockSpec((TB, IN_FEATURES), lambda i: (i, 0)),
            # weight row: same block every step -> stays resident in VMEM
            pl.BlockSpec((1, IN_FEATURES), lambda i: (0, 0)),
            # bias scalar in SMEM, also resident
            pl.BlockSpec((1, 1), lambda i: (0, 0), memory_space=pltpu.SMEM),
        ],
        # lane-dense output slab: one (1, TB) row per tile, unmasked stores
        out_specs=pl.BlockSpec((1, TB), lambda i: (i, 0)),
        compiler_params=pltpu.CompilerParams(
            dimension_semantics=("parallel",),   # megacore split on v7x
            vmem_limit_bytes=vmem_limit,
        ),
        cost_estimate=cost,
    )(x, w2d, b2d)

    # (num_tiles, TB) slab -> (B, 1); padding rows of the last tile are dropped.
    return out.reshape(-1)[:B, None]


if __name__ == "__main__":
    key = jax.random.PRNGKey(0)
    kx, kw, kb, kx2 = jax.random.split(key, 4)

    # "uniform_" style init, matching nn.init.uniform_ (U[0,1)):
    # 784 scalar weights -> flat (784,), bias -> (1,)
    weights = jax.random.uniform(kw, (IN_FEATURES,), dtype=jnp.float32)
    bias = jax.random.uniform(kb, (1,), dtype=jnp.float32)

    # --- small-shape check (single block path), batch=2 as per module usage ---
    B = 2
    x = jax.random.normal(kx, (B, IN_FEATURES), dtype=jnp.float32)
    out = jax.block_until_ready(linearnet_forward(x, weights, bias))
    ref = (x @ weights)[:, None] + bias[0]
    assert out.shape == (B, 1)
    assert jnp.allclose(out, ref, rtol=1e-5, atol=1e-5)

    # --- grid / ragged-tile check: B not divisible by the batch tile ----------
    B2 = 520
    x2 = jax.random.normal(kx2, (B2, IN_FEATURES), dtype=jnp.float32)
    out2 = jax.block_until_ready(
        linearnet_forward(x2, weights, bias, batch_tile=256))  # grid=(3,), partial last tile
    ref2 = (x2 @ weights)[:, None] + bias[0]
    assert out2.shape == (B2, 1)
    assert jnp.allclose(out2, ref2, rtol=1e-5, atol=1e-5)

    print("KERNEL_OK")
</pallas_src>

<mosaic_0001>
module attributes {stable_mosaic.version = 11 : i64} {
  func.func @linearnet_kernel(%arg0: i32, %arg1: memref<2x784xf32, #tpu.memory_space<vmem>>, %arg2: memref<1x784xf32, #tpu.memory_space<vmem>>, %arg3: memref<1x1xf32, #tpu.memory_space<smem>>, %arg4: memref<1x2xf32, #tpu.memory_space<vmem>>) attributes {dimension_semantics = [#tpu.dimension_semantics<parallel>], iteration_bounds = array<i64: 1>, scalar_prefetch = 0 : i64, scratch_operands = 0 : i64, tpu.core_type = #tpu.core_type<tc>, window_params = [{transform_indices = @transform_0, window_bounds = array<i64: 2, 784>}, {pipeline_mode = #tpu.pipeline_mode<synchronous>, transform_indices = @transform_1, window_bounds = array<i64: 1, 784>}, {transform_indices = @transform_2, window_bounds = array<i64: 1, 1>}, {transform_indices = @transform_3, window_bounds = array<i64: 1, 2>}]} {
    %c0 = arith.constant 0 : index
    %c0_0 = arith.constant 0 : index
    %0 = vector.load %arg1[%c0, %c0_0] : memref<2x784xf32, #tpu.memory_space<vmem>>, vector<2x784xf32>
    %c0_1 = arith.constant 0 : index
    %c0_2 = arith.constant 0 : index
    %1 = vector.load %arg2[%c0_1, %c0_2] : memref<1x784xf32, #tpu.memory_space<vmem>>, vector<1x784xf32>
    %c0_3 = arith.constant 0 : index
    %c0_4 = arith.constant 0 : index
    %2 = memref.load %arg3[%c0_3, %c0_4] : memref<1x1xf32, #tpu.memory_space<smem>>
    %3 = vector.broadcast %1 : vector<1x784xf32> to vector<2x784xf32>
    %4 = arith.mulf %0, %3 : vector<2x784xf32>
    %cst = arith.constant dense<0.000000e+00> : vector<2xf32>
    %5 = vector.multi_reduction <add>, %4, %cst [1] : vector<2x784xf32> to vector<2xf32>
    %6 = vector.broadcast %2 : f32 to vector<2xf32>
    %7 = arith.addf %5, %6 : vector<2xf32>
    %8 = vector.shape_cast %7 : vector<2xf32> to vector<1x2xf32>
    %c0_5 = arith.constant 0 : index
    %c0_6 = arith.constant 0 : index
    %9 = vector.load %arg4[%c0_5, %c0_6] : memref<1x2xf32, #tpu.memory_space<vmem>>, vector<1x2xf32>
    tpu.vector_store %arg4[%c0_5, %c0_6], %8 {strides = array<i32>} : memref<1x2xf32, #tpu.memory_space<vmem>>, vector<1x2xf32>,
    return
  }
  func.func @transform_0(%arg0: i32) -> (i32, i32) {
    %c0_i32 = arith.constant 0 : i32
    %c0_i32_0 = arith.constant 0 : i32
    return %arg0, %c0_i32 : i32, i32
  }
  func.func @transform_1(%arg0: i32) -> (i32, i32) {
    %c0_i32 = arith.constant 0 : i32
    %c0_i32_0 = arith.constant 0 : i32
    %c0_i32_1 = arith.constant 0 : i32
    return %c0_i32, %c0_i32_0 : i32, i32
  }
  func.func @transform_2(%arg0: i32) -> (i32, i32) {
    %c0_i32 = arith.constant 0 : i32
    %c0_i32_0 = arith.constant 0 : i32
    %c0_i32_1 = arith.constant 0 : i32
    return %c0_i32, %c0_i32_0 : i32, i32
  }
  func.func @transform_3(%arg0: i32) -> (i32, i32) {
    %c0_i32 = arith.constant 0 : i32
    %c0_i32_0 = arith.constant 0 : i32
    return %arg0, %c0_i32 : i32, i32
  }
}

</mosaic_0001>

<llo_original>
// kernel: tpu_custom_call.1
$region0: #{tpu_custom_call.1}
  #allocation0 [shape = 'u32[]', space=smem, size = 0x4, offset = 0x4, fixed_abs, tag = 'smem constant byte address 0x4 - core index']
  #allocation1 [shape = 'u32[144,128]{1,0:T(1,128)}', space=vmem, size = 0x12000, scoped, tag = 'internal scratch']
  #allocation2 [shape = 'f32[1,1]{1,0:T(1,128)S(6)}', space=smem, size = 0x200, scoped, tag = 'scoped memory for tpu_custom_call.1']
  %s0 = inlined_call_operand.hbm [shape: f32[2,784], index: 0, kind: input, shape index: {}]
  %s1 = inlined_call_operand.hbm [shape: f32[1,784], index: 1, kind: input, shape index: {}]
  %s2 = inlined_call_operand.<no memory space> [shape: f32[1,1], index: 2, kind: input, shape index: {}]
  %s3 = inlined_call_operand.hbm [shape: f32[1,2], index: 3, kind: output, shape index: {}]
  %s4 = sld [smem:[#allocation0]]
  $region30: #{tpu_custom_call.1} parent=0
    _
  %s6 = ssub.s32 1, %s4
  %s7 = scalar_select 0, %s6, %s4
  %8 = sst [smem:[#allocation2]] %s2
  $region1: #{tpu_custom_call.1} parent=0
    #allocation3 [shape = 'u8[7168]{0}', space=vmem, size = 0x1c00, scoped, tag = 'input window, operand 0, single buffered']
    #allocation4 [shape = 's32[1]{0}', space=sflag, size = 0x4, scoped, tag = 'scoped memory for tpu_custom_call.1']
    #allocation5 [shape = 's32[1]{0}', space=sflag, size = 0x4, scoped, tag = 'scoped memory for tpu_custom_call.1']
    #allocation6 [shape = 'u8[3584]{0}', space=vmem, size = 0x1000, scoped, tag = 'input window, operand 1, single buffered']
    #allocation7 [shape = 's32[1]{0}', space=sflag, size = 0x4, scoped, tag = 'scoped memory for tpu_custom_call.1']
    #allocation8 [shape = 'u8[512]{0}', space=vmem, size = 0x400, scoped, tag = 'output window, operand 0, single buffered']
    %9 = vsyncpa [#allocation4], 0
    %10 = vsyncpa [#allocation7], 0
    %11 = vsyncpa [#allocation5], 0
    // Predicated region
    $region2: #{tpu_custom_call.1} parent=1 // pred_check
      _
    $region3: #{tpu_custom_call.1} parent=1 // pred_check_branch
      %13 = sbr.rel (0) target = $region5
    $region4: #{tpu_custom_call.1} parent=1 // pred_region
      %s15 = ssub.s32 224, 224
      %16 = vsyncadd [#allocation4], %s15
      %s18 = sshll.u32 [#allocation3], 4
      %s19 = int_to_ptr.vmem [resolvable:$true] %s18
      %21 = dma.hbm_to_vmem [thread:$0]  %s0, 224, %s19, [#allocation4]
    $region5: #{tpu_custom_call.1} parent=1 // pred_fallthru
      _
    // Predicated region
    $region6: #{tpu_custom_call.1} parent=1 // pred_check
      _
    $region7: #{tpu_custom_call.1} parent=1 // pred_check_branch
      %23 = sbr.rel (0) target = $region9
    $region8: #{tpu_custom_call.1} parent=1 // pred_region
      %s25 = ssub.s32 112, 112
      %26 = vsyncadd [#allocation7], %s25
      %s28 = sshll.u32 [#allocation6], 4
      %s29 = int_to_ptr.vmem [resolvable:$true] %s28
      %31 = dma.hbm_to_vmem [thread:$0]  %s1, 112, %s29, [#allocation7]
    $region9: #{tpu_custom_call.1} parent=1 // pred_fallthru
      _
    // Predicated region
    $region10: #{tpu_custom_call.1} parent=1 // pred_check
      _
    $region11: #{tpu_custom_call.1} parent=1 // pred_check_branch
      %33 = sbr.rel (0) target = $region13
    $region12: #{tpu_custom_call.1} parent=1 // pred_region
      _
    $region13: #{tpu_custom_call.1} parent=1 // pred_fallthru
      _
    // Predicated region
    $region14: #{tpu_custom_call.1} parent=1 // pred_check
      _
    $region15: #{tpu_custom_call.1} parent=1 // pred_check_branch
      %35 = sbr.rel (0) target = $region17
    $region16: #{tpu_custom_call.1} parent=1 // pred_region
      %36 = dma.done [#allocation4], 224
    $region17: #{tpu_custom_call.1} parent=1 // pred_fallthru
      _
    // Predicated region
    $region18: #{tpu_custom_call.1} parent=1 // pred_check
      _
    $region19: #{tpu_custom_call.1} parent=1 // pred_check_branch
      %38 = sbr.rel (0) target = $region21
    $region20: #{tpu_custom_call.1} parent=1 // pred_region
      %39 = dma.done [#allocation7], 112
    $region21: #{tpu_custom_call.1} parent=1 // pred_fallthru
      _
    %v40 = vld [vmem:[#allocation3] sm:$0xff]
    %v41 = vld [vmem:[#allocation3 + $0x8] sm:$0x3f]
    %v42 = vld [vmem:[#allocation6] sm:$0x7f]
    %s43 = sld [smem:[#allocation2]]
    %v45 = vlaneseq
    %v46 = vshrl.u32 %v45, 7
    %v47 = vsub.s32 0, %v46
    %v48 = vrot.slane %v42, %v47
    %v49 = vlaneseq
    %v50 = vshrl.u32 %v49, 7
    %v51 = vsub.s32 1, %v50
    %v52 = vrot.slane %v42, %v51
    %v53 = vlaneseq
    %v54 = vshrl.u32 %v53, 7
    %v55 = vsub.s32 2, %v54
    %v56 = vrot.slane %v42, %v55
    %v57 = vlaneseq
    %v58 = vshrl.u32 %v57, 7
    %v59 = vsub.s32 3, %v58
    %v60 = vrot.slane %v42, %v59
    %v61 = vlaneseq
    %v62 = vshrl.u32 %v61, 7
    %v63 = vsub.s32 4, %v62
    %v64 = vrot.slane %v42, %v63
    %v65 = vlaneseq
    %v66 = vshrl.u32 %v65, 7
    %v67 = vsub.s32 5, %v66
    %v68 = vrot.slane %v42, %v67
    %v69 = vlaneseq
    %v70 = vshrl.u32 %v69, 7
    %v71 = vsub.s32 6, %v70
    %v72 = vrot.slane %v42, %v71
    %v73 = vcombine.low %v48, %v52
    %v74 = vcombine.low %v56, %v60
    %v76 = vunpack.c.l.s4 1983009808
    %v77 = vunpack.c.0.s8 %v76
    %v78 = vlaneseq
    %v79 = vshrl.u32 %v78, 7
    %v80 = vsub.s32 %v77, %v79
    %v81 = vrot.slane %v73, %v80
    %v83 = vunpack.c.l.s4 1983009808
    %v84 = vunpack.c.0.s8 %v83
    %v85 = vlaneseq
    %v86 = vshrl.u32 %v85, 7
    %v87 = vsub.s32 %v84, %v86
    %v88 = vrot.slane %v74, %v87
    %v89 = vcombine.low %v81, %v88
    %v90 = vcombine.low %v64, %v68
    %v92 = vunpack.c.l.s4 1983009808
    %v93 = vunpack.c.0.s8 %v92
    %v94 = vlaneseq
    %v95 = vshrl.u32 %v94, 7
    %v96 = vsub.s32 %v93, %v95
    %v97 = vrot.slane %v90, %v96
    %v99 = vunpack.c.l.s4 1983009808
    %v100 = vunpack.c.0.s8 %v99
    %v101 = vlaneseq
    %v102 = vshrl.u32 %v101, 7
    %v103 = vsub.s32 %v100, %v102
    %v104 = vrot.slane %v72, %v103
    %v105 = vcombine.low %v97, %v104
    %v108 = vmul.f32 %v40, %v89
    %v109 = vmul.f32 %v41, %v105
    %v112 = vcombine.high %v108, %v108
    %v114 = vunpack.c.l.s4 1983009808
    %v115 = vunpack.c.0.s8 %v114
    %v116 = vlaneseq
    %v117 = vshrl.u32 %v116, 7
    %v118 = vsub.s32 %v115, %v117
    %v119 = vrot.slane %v108, %v118
    %v121 = vunpack.c.l.s4 1983009808
    %v122 = vunpack.c.0.s8 %v121
    %v123 = vlaneseq
    %v124 = vshrl.u32 %v123, 7
    %v125 = vsub.s32 %v122, %v124
    %v126 = vrot.slane %v112, %v125
    %v127 = vcombine.high %v119, %v119
    %v128 = vcombine.high %v126, %v126
    %v129 = vcombine.high %v109, %v109
    %v131 = vunpack.c.l.s4 1983009808
    %v132 = vunpack.c.0.s8 %v131
    %v133 = vlaneseq
    %v134 = vshrl.u32 %v133, 7
    %v135 = vsub.s32 %v132, %v134
    %v136 = vrot.slane %v109, %v135
    %v138 = vunpack.c.l.s4 1983009808
    %v139 = vunpack.c.0.s8 %v138
    %v140 = vlaneseq
    %v141 = vshrl.u32 %v140, 7
    %v142 = vsub.s32 %v139, %v141
    %v143 = vrot.slane %v129, %v142
    %v144 = vcombine.high %v136, %v136
    %vm152 = vcmask 1041408
    %v153 = vsel %vm152, %v119, 0.0
    %v154 = vsel %vm152, %v127, 0.0
    %v155 = vadd.f32 %v153, %v154
    %v156 = vsel %vm152, %v126, 0.0
    %v157 = vadd.f32 %v155, %v156
    %v158 = vsel %vm152, %v128, 0.0
    %v159 = vadd.f32 %v157, %v158
    %v160 = vsel %vm152, %v136, 0.0
    %v161 = vadd.f32 %v159, %v160
    %v162 = vsel %vm152, %v144, 0.0
    %v163 = vadd.f32 %v161, %v162
    %vm164 = vcmask 123904
    %v165 = vsel %vm164, %v143, 0.0
    %v166 = vadd.f32 %v163, %v165
    %167 = vadd.xlane.f32.xlu0 %v166
    %v168 = vpop.xlane.xlu0 %167
    %v169 = vstv %s43
    %v170 = vadd.f32 %v168, %v169
    %v172 = vlaneseq
    %v173 = vand.u32 %v172, 127
    %v174 = vlaneseq
    %v175 = vshrl.u32 %v174, 7
    %v176 = vsub.s32 %v173, %v175
    %v177 = vrot.slane %v170, %v176
    %vm179 = vcmask 8192
    %180 = vst.msk [vmem:[#allocation8] sm:$0x1] %vm179, %v177
    // Predicated region
    $region22: #{tpu_custom_call.1} parent=1 // pred_check
      _
    $region23: #{tpu_custom_call.1} parent=1 // pred_check_branch
      %182 = sbr.rel (0) target = $region25
    $region24: #{tpu_custom_call.1} parent=1 // pred_region
      %s184 = ssub.s32 16, 16
      %185 = vsyncadd [#allocation5], %s184
      %s187 = sshll.u32 [#allocation8], 4
      %s188 = int_to_ptr.vmem [resolvable:$true] %s187
      %190 = dma.vmem_to_hbm [thread:$0]  %s188, 16, %s3, [#allocation5]
    $region25: #{tpu_custom_call.1} parent=1 // pred_fallthru
      _
    // Predicated region
    $region26: #{tpu_custom_call.1} parent=1 // pred_check
      _
    $region27: #{tpu_custom_call.1} parent=1 // pred_check_branch
      %192 = sbr.rel (0) target = $region29
    $region28: #{tpu_custom_call.1} parent=1 // pred_region
      %193 = dma.done [#allocation5], 16
    $region29: #{tpu_custom_call.1} parent=1 // pred_fallthru
      _
    %194 = vsyncpa [#allocation4], 1
    %195 = vsyncpa [#allocation7], 1
    %196 = vsyncpa [#allocation5], 1

</llo_original>
